<compile_context>
chip_gen: v7x
topology: tpu7x:2x2x1
jax: 0.10.0
libtpu: 0.0.40
codegen_flags: <defaults>
</compile_context>

<pallas_src>
import functools

import jax
import jax.numpy as jnp
from jax import lax
from jax.experimental import pallas as pl
from jax.experimental.pallas import tpu as pltpu

LANES = 128
SUBLANES = 8
CHUNK = SUBLANES * LANES            # 1024-element alignment unit for the 2-D slab
MAX_TILE_ROWS = 8192                # 8192 * 128 * 4B = 4 MiB f32 per block
VMEM_LIMIT_BYTES = 32 * 1024 * 1024 # explicit: raises v5e's 16 MiB default, <= v6e/v7x default


def _num_partitions() -> int:
    """One streaming partition per TensorCore: 2 on v7x, 1 on v5e/v6e."""
    try:
        kind = jax.devices()[0].device_kind.lower()
    except Exception:
        return 1
    return 2 if ("v7" in kind or "tpu7" in kind) else 1


def _loss_dsc_real_kernel(x_ref, o_ref, acc_ref, *,
                          tiles_per_part, tile_rows, valid_rows):
    p = pl.program_id(0)   # partition (parallel)
    t = pl.program_id(1)   # tile within partition (arbitrary / reduction)

    @pl.when(t == 0)
    def _init():
        acc_ref[...] = jnp.zeros_like(acc_ref)      # only an (8,128) vreg-sized zero

    # Logical (unclamped) tile this step is responsible for.  The input
    # index_map clamps to the last real tile, so logically out-of-range tiles
    # just re-read valid data that the mask below zeroes out.
    logical_tile = p * tiles_per_part + t
    row0 = logical_tile * tile_rows

    x = x_ref[...].astype(jnp.float32)              # in-kernel cast (free on VPU)
    r = jnp.maximum(1.0 - x, 0.0)                   # relu(1 - r)

    # Steady state: whole tile valid -> fold block into the (8,128) accumulator
    # with a pure in-register VPU add chain (no full-tile accumulator RMW).
    @pl.when(row0 + tile_rows <= valid_rows)
    def _full():
        acc_ref[...] += r.reshape(tile_rows // SUBLANES, SUBLANES, LANES).sum(axis=0)

    # Boundary / out-of-range tile: select-mask rows past the end of real data
    # (select, not multiply — out-of-bounds garbage may be Inf/NaN).
    @pl.when(row0 + tile_rows > valid_rows)
    def _partial():
        rid = lax.broadcasted_iota(jnp.int32, (tile_rows, LANES), 0)
        mask = rid < (valid_rows - row0)
        rm = jnp.where(mask, r, 0.0)
        acc_ref[...] += rm.reshape(tile_rows // SUBLANES, SUBLANES, LANES).sum(axis=0)

    # Single cross-lane reduce of one vreg + scalar store, once per partition.
    @pl.when(t == tiles_per_part - 1)
    def _finalize():
        o_ref[0, 0] = jnp.sum(acc_ref[...])


def loss_dsc_real(r: jax.Array) -> jax.Array:
    """loss = mean(relu(1 - r)), computed in a Pallas TPU kernel."""
    n_elems = r.size
    flat = r.reshape(-1)                            # reshape is free; native dtype kept

    n_main = (n_elems // CHUNK) * CHUNK             # aligned prefix handled by the kernel
    rows = n_main // LANES                          # always a multiple of SUBLANES

    # <= 1023 trailing elements: tiny jnp expression instead of an O(n) pad/concat.
    if n_main < n_elems:
        tail = flat[n_main:]
        tail_sum = jnp.sum(jnp.maximum(1.0 - tail.astype(jnp.float32), 0.0))
    else:
        tail_sum = jnp.float32(0.0)

    if rows == 0:
        # Input smaller than one aligned chunk: nothing left for the kernel.
        return tail_sum / jnp.float32(n_elems)

    x2d = (flat if n_main == n_elems else flat[:n_main]).reshape(rows, LANES)

    num_partitions = _num_partitions()
    tile_rows = min(MAX_TILE_ROWS, rows)            # full-dim block for small inputs
    total_tiles = pl.cdiv(rows, tile_rows)
    tiles_per_part = pl.cdiv(total_tiles, num_partitions)

    kernel = functools.partial(
        _loss_dsc_real_kernel,
        tiles_per_part=tiles_per_part,
        tile_rows=tile_rows,
        valid_rows=rows,
    )

    def in_map(p, t):
        # Clamp so the DMA never starts at a fully out-of-range tile; the
        # kernel masks such tiles (logical rows >= valid_rows) to zero.
        return (jnp.minimum(p * tiles_per_part + t, total_tiles - 1), 0)

    cost = pl.CostEstimate(
        flops=2 * n_elems,
        transcendentals=0,
        bytes_accessed=n_main * x2d.dtype.itemsize + 4 * num_partitions,
    )

    partials = pl.pallas_call(
        kernel,
        out_shape=jax.ShapeDtypeStruct((num_partitions, 1), jnp.float32),
        grid_spec=pltpu.PrefetchScalarGridSpec(
            num_scalar_prefetch=0,
            grid=(num_partitions, tiles_per_part),
            in_specs=[pl.BlockSpec((tile_rows, LANES), in_map)],
            out_specs=pl.BlockSpec((1, 1), lambda p, t: (p, 0),
                                   memory_space=pltpu.SMEM),
            scratch_shapes=[pltpu.VMEM((SUBLANES, LANES), jnp.float32)],
        ),
        compiler_params=pltpu.CompilerParams(
            # TODO(synk): on v7x, if Mosaic does not shard a plain "parallel"
            # leading axis across the two TensorCores, switch it to
            # pltpu.CORE_PARALLEL (grid extent already equals the TC count).
            dimension_semantics=("parallel", "arbitrary"),
            vmem_limit_bytes=VMEM_LIMIT_BYTES,
        ),
        cost_estimate=cost,
    )(x2d)

    # Mean over the ORIGINAL element count (masked tiles contribute exactly 0).
    return (jnp.sum(partials) + tail_sum) / jnp.float32(n_elems)


def loss_dsc_real_ref(r: jax.Array) -> jax.Array:
    """Pure-JAX reference matching the PyTorch module semantics."""
    return jnp.mean(jnp.maximum(1.0 - r.astype(jnp.float32), 0.0))


if __name__ == "__main__":
    # Primary test: discriminator score map [N, C, H, W], aligned size.
    r = jax.random.normal(jax.random.PRNGKey(0), (2, 4, 16, 16), dtype=jnp.float32)
    out = jax.block_until_ready(loss_dsc_real(r))
    ref = jax.block_until_ready(loss_dsc_real_ref(r))
    assert out.shape == (), f"expected scalar, got {out.shape}"
    assert jnp.allclose(out, ref, rtol=1e-5, atol=1e-6), (out, ref)

    # Multi-tile + in-kernel boundary mask (rows=9000 > MAX_TILE_ROWS, not a multiple).
    r2 = jax.random.normal(jax.random.PRNGKey(1), (9, 1000, 128), dtype=jnp.float32)
    out2 = jax.block_until_ready(loss_dsc_real(r2))
    ref2 = jax.block_until_ready(loss_dsc_real_ref(r2))
    assert jnp.allclose(out2, ref2, rtol=1e-4, atol=1e-6), (out2, ref2)

    # Unaligned size: kernel on aligned prefix + tiny tail expression.
    r3 = jax.random.normal(jax.random.PRNGKey(2), (2, 4, 16, 17), dtype=jnp.float32)
    out3 = jax.block_until_ready(loss_dsc_real(r3))
    ref3 = jax.block_until_ready(loss_dsc_real_ref(r3))
    assert jnp.allclose(out3, ref3, rtol=1e-5, atol=1e-6), (out3, ref3)

    # Tiny input (< one aligned chunk): pure tail path.
    r4 = jax.random.normal(jax.random.PRNGKey(3), (3, 1, 7, 5), dtype=jnp.float32)
    out4 = jax.block_until_ready(loss_dsc_real(r4))
    ref4 = jax.block_until_ready(loss_dsc_real_ref(r4))
    assert jnp.allclose(out4, ref4, rtol=1e-5, atol=1e-6), (out4, ref4)

    # bf16 input (in-kernel cast to f32).
    r5 = jax.random.normal(jax.random.PRNGKey(4), (2, 4, 16, 16)).astype(jnp.bfloat16)
    out5 = jax.block_until_ready(loss_dsc_real(r5))
    ref5 = jax.block_until_ready(loss_dsc_real_ref(r5))
    assert jnp.allclose(out5, ref5, rtol=1e-5, atol=1e-6), (out5, ref5)

    print("KERNEL_OK")
</pallas_src>

<mosaic_0001>
module attributes {stable_mosaic.version = 11 : i64} {
  func.func @_loss_dsc_real_kernel(%arg0: i32, %arg1: i32, %arg2: memref<16x128xf32, #tpu.memory_space<vmem>>, %arg3: memref<1x1xf32, #tpu.memory_space<smem>>, %arg4: memref<8x128xf32, #tpu.memory_space<vmem>>) attributes {dimension_semantics = [#tpu.dimension_semantics<parallel>, #tpu.dimension_semantics<arbitrary>], iteration_bounds = array<i64: 1, 1>, scalar_prefetch = 0 : i64, scratch_operands = 1 : i64, tpu.core_type = #tpu.core_type<tc>, window_params = [{transform_indices = @transform_0, window_bounds = array<i64: 16, 128>}, {transform_indices = @transform_1, window_bounds = array<i64: 1, 1>}]} {
    %c0_i32 = arith.constant 0 : i32
    %0 = arith.cmpi eq, %arg1, %c0_i32 : i32
    %1 = arith.extui %0 : i1 to i32
    %c0_i32_0 = arith.constant 0 : i32
    %2 = arith.cmpi ne, %1, %c0_i32_0 : i32
    scf.if %2 {
      %cst_11 = arith.constant 0.000000e+00 : f32
      %22 = vector.broadcast %cst_11 : f32 to vector<8x128xf32>
      %c0_12 = arith.constant 0 : index
      %c0_13 = arith.constant 0 : index
      %23 = vector.load %arg4[%c0_12, %c0_13] : memref<8x128xf32, #tpu.memory_space<vmem>>, vector<8x128xf32>
      tpu.vector_store %arg4[%c0_12, %c0_13], %22 {strides = array<i32>} : memref<8x128xf32, #tpu.memory_space<vmem>>, vector<8x128xf32>,
    } else {
    }
    %c1_i32 = arith.constant 1 : i32
    %3 = arith.muli %arg0, %c1_i32 : i32
    %4 = arith.addi %3, %arg1 : i32
    %c16_i32 = arith.constant 16 : i32
    %5 = arith.muli %4, %c16_i32 : i32
    %c0 = arith.constant 0 : index
    %c0_1 = arith.constant 0 : index
    %6 = vector.load %arg2[%c0, %c0_1] : memref<16x128xf32, #tpu.memory_space<vmem>>, vector<16x128xf32>
    %cst = arith.constant 1.000000e+00 : f32
    %7 = vector.broadcast %cst : f32 to vector<16x128xf32>
    %8 = arith.subf %7, %6 : vector<16x128xf32>
    %cst_2 = arith.constant 0.000000e+00 : f32
    %9 = vector.broadcast %cst_2 : f32 to vector<16x128xf32>
    %10 = arith.maximumf %8, %9 : vector<16x128xf32>
    %c16_i32_3 = arith.constant 16 : i32
    %11 = arith.addi %5, %c16_i32_3 : i32
    %c16_i32_4 = arith.constant 16 : i32
    %12 = arith.cmpi sle, %11, %c16_i32_4 : i32
    %13 = arith.extui %12 : i1 to i32
    %c0_i32_5 = arith.constant 0 : i32
    %14 = arith.cmpi ne, %13, %c0_i32_5 : i32
    scf.if %14 {
      %c0_11 = arith.constant 0 : index
      %c0_12 = arith.constant 0 : index
      %22 = vector.load %arg4[%c0_11, %c0_12] : memref<8x128xf32, #tpu.memory_space<vmem>>, vector<8x128xf32>
      %23 = vector.shape_cast %10 : vector<16x128xf32> to vector<2x8x128xf32>
      %cst_13 = arith.constant dense<0.000000e+00> : vector<8x128xf32>
      %24 = vector.multi_reduction <add>, %23, %cst_13 [0] : vector<2x8x128xf32> to vector<8x128xf32>
      %25 = arith.addf %22, %24 : vector<8x128xf32>
      %c0_14 = arith.constant 0 : index
      %c0_15 = arith.constant 0 : index
      %26 = vector.load %arg4[%c0_14, %c0_15] : memref<8x128xf32, #tpu.memory_space<vmem>>, vector<8x128xf32>
      tpu.vector_store %arg4[%c0_14, %c0_15], %25 {strides = array<i32>} : memref<8x128xf32, #tpu.memory_space<vmem>>, vector<8x128xf32>,
    } else {
    }
    %c16_i32_6 = arith.constant 16 : i32
    %15 = arith.addi %5, %c16_i32_6 : i32
    %c16_i32_7 = arith.constant 16 : i32
    %16 = arith.cmpi sgt, %15, %c16_i32_7 : i32
    %17 = arith.extui %16 : i1 to i32
    %c0_i32_8 = arith.constant 0 : i32
    %18 = arith.cmpi ne, %17, %c0_i32_8 : i32
    scf.if %18 {
      %22 = tpu.iota {dimensions = array<i32: 0>} : vector<16x128xi32>
      %c16_i32_11 = arith.constant 16 : i32
      %23 = arith.subi %c16_i32_11, %5 : i32
      %24 = vector.broadcast %23 : i32 to vector<16x128xi32>
      %25 = arith.cmpi slt, %22, %24 : vector<16x128xi32>
      %cst_12 = arith.constant 0.000000e+00 : f32
      %26 = vector.broadcast %cst_12 : f32 to vector<16x128xf32>
      %27 = arith.select %25, %10, %26 : vector<16x128xi1>, vector<16x128xf32>
      %c0_13 = arith.constant 0 : index
      %c0_14 = arith.constant 0 : index
      %28 = vector.load %arg4[%c0_13, %c0_14] : memref<8x128xf32, #tpu.memory_space<vmem>>, vector<8x128xf32>
      %29 = vector.shape_cast %27 : vector<16x128xf32> to vector<2x8x128xf32>
      %cst_15 = arith.constant dense<0.000000e+00> : vector<8x128xf32>
      %30 = vector.multi_reduction <add>, %29, %cst_15 [0] : vector<2x8x128xf32> to vector<8x128xf32>
      %31 = arith.addf %28, %30 : vector<8x128xf32>
      %c0_16 = arith.constant 0 : index
      %c0_17 = arith.constant 0 : index
      %32 = vector.load %arg4[%c0_16, %c0_17] : memref<8x128xf32, #tpu.memory_space<vmem>>, vector<8x128xf32>
      tpu.vector_store %arg4[%c0_16, %c0_17], %31 {strides = array<i32>} : memref<8x128xf32, #tpu.memory_space<vmem>>, vector<8x128xf32>,
    } else {
    }
    %c0_i32_9 = arith.constant 0 : i32
    %19 = arith.cmpi eq, %arg1, %c0_i32_9 : i32
    %20 = arith.extui %19 : i1 to i32
    %c0_i32_10 = arith.constant 0 : i32
    %21 = arith.cmpi ne, %20, %c0_i32_10 : i32
    scf.if %21 {
      %c0_11 = arith.constant 0 : index
      %c0_12 = arith.constant 0 : index
      %22 = vector.load %arg4[%c0_11, %c0_12] : memref<8x128xf32, #tpu.memory_space<vmem>>, vector<8x128xf32>
      %23 = vector.shape_cast %22 : vector<8x128xf32> to vector<1x8x128xf32>
      %cst_13 = arith.constant dense<0.000000e+00> : vector<1xf32>
      %24 = vector.multi_reduction <add>, %23, %cst_13 [1, 2] : vector<1x8x128xf32> to vector<1xf32>
      %25 = vector.shape_cast %24 : vector<1xf32> to vector<1x1x1xf32>
      %26 = vector.extract %25[0, 0, 0] : f32 from vector<1x1x1xf32>
      %c0_14 = arith.constant 0 : index
      %c0_15 = arith.constant 0 : index
      %27 = memref.load %arg3[%c0_14, %c0_15] : memref<1x1xf32, #tpu.memory_space<smem>>
      memref.store %26, %arg3[%c0_14, %c0_15] : memref<1x1xf32, #tpu.memory_space<smem>>
    } else {
    }
    return
  }
  func.func @transform_0(%arg0: i32, %arg1: i32) -> (i32, i32) {
    %c1_i32 = arith.constant 1 : i32
    %0 = arith.muli %arg0, %c1_i32 : i32
    %1 = arith.addi %0, %arg1 : i32
    %c0_i32 = arith.constant 0 : i32
    %2 = arith.minsi %1, %c0_i32 : i32
    %c0_i32_0 = arith.constant 0 : i32
    %c0_i32_1 = arith.constant 0 : i32
    return %2, %c0_i32_0 : i32, i32
  }
  func.func @transform_1(%arg0: i32, %arg1: i32) -> (i32, i32) {
    %c0_i32 = arith.constant 0 : i32
    %c0_i32_0 = arith.constant 0 : i32
    return %arg0, %c0_i32 : i32, i32
  }
}

</mosaic_0001>

<llo_original>
// kernel: tpu_custom_call.1
$region0: #{tpu_custom_call.1}
  #allocation0 [shape = 'u32[]', space=smem, size = 0x4, offset = 0x4, fixed_abs, tag = 'smem constant byte address 0x4 - core index']
  #allocation1 [shape = 'u32[144,128]{1,0:T(1,128)}', space=vmem, size = 0x12000, scoped, tag = 'internal scratch']
  #allocation2 [shape = 'f32[8,128]{1,0:T(8,128)}', space=vmem, size = 0x1000, scoped, tag = 'scratch operand']
  %s0 = inlined_call_operand.hbm [shape: f32[16,128], index: 0, kind: input, shape index: {}]
  %s1 = inlined_call_operand.hbm [shape: f32[1,1], index: 1, kind: output, shape index: {}]
  %s2 = sld [smem:[#allocation0]]
  $region34: #{tpu_custom_call.1} parent=0
    _
  %s4 = ssub.s32 1, %s2
  %s5 = scalar_select 0, %s4, %s2
  $region1: #{tpu_custom_call.1} parent=0
    #allocation3 [shape = 'u8[8192]{0}', space=vmem, size = 0x2000, scoped, tag = 'input window, operand 0, single buffered']
    #allocation4 [shape = 's32[1]{0}', space=sflag, size = 0x4, scoped, tag = 'scoped memory for tpu_custom_call.1']
    #allocation5 [shape = 's32[1]{0}', space=sflag, size = 0x4, scoped, tag = 'scoped memory for tpu_custom_call.1']
    #allocation6 [shape = 'u8[512]{0}', space=smem, size = 0x200, scoped, tag = 'output window, operand 0, single buffered']
    %6 = vsyncpa [#allocation4], 0
    %7 = vsyncpa [#allocation5], 0
    // Predicated region
    $region2: #{tpu_custom_call.1} parent=1 // pred_check
      _
    $region3: #{tpu_custom_call.1} parent=1 // pred_check_branch
      %9 = sbr.rel (0) target = $region5
    $region4: #{tpu_custom_call.1} parent=1 // pred_region
      %s10 = sadd.s32 0, 0
      %p11 = scmp.lt.s32.totalorder %s10, 0
      %s12 = scalar_select %p11, %s10, 0
      %s13 = smul.u32 2, %s12
      %s15 = ssub.s32 256, 256
      %16 = vsyncadd [#allocation4], %s15
      %s17 = smul.addr %s13, 128
      %s18 = scalar_lea.hbm %s0, %s17
      %s19 = sshll.u32 [#allocation3], 4
      %s20 = int_to_ptr.vmem [resolvable:$true] %s19
      %25 = dma.hbm_to_vmem [thread:$0]  %s18, 256, %s20, [#allocation4], 128, 128, 8
    $region5: #{tpu_custom_call.1} parent=1 // pred_fallthru
      _
    // Predicated region
    $region6: #{tpu_custom_call.1} parent=1 // pred_check
      _
    $region7: #{tpu_custom_call.1} parent=1 // pred_check_branch
      %27 = sbr.rel (0) target = $region9
    $region8: #{tpu_custom_call.1} parent=1 // pred_region
      %28 = dma.done [#allocation4], 256
    $region9: #{tpu_custom_call.1} parent=1 // pred_fallthru
      _
    %s29 = sadd.s32 0, 0
    %p30 = scmp.lt.s32.totalorder %s29, 0
    %s31 = scalar_select %p30, %s29, 0
    %s32 = smul.u32 2, %s31
    %p33 = scmp.eq.s32.totalorder 0, 0
    // Predicated region
    $region10: #{tpu_custom_call.1} parent=1 // pred_check
      %p34 = pneg %p33
    $region11: #{tpu_custom_call.1} parent=1 // pred_check_branch
      %36 = sbr.rel (%p34) target = $region13
    $region12: #{tpu_custom_call.1} parent=1 // pred_region
      %37 = vst [vmem:[#allocation2] sm:$0xff] 0.0
    $region13: #{tpu_custom_call.1} parent=1 // pred_fallthru
      _
    %s38 = sadd.s32 0, 0
    %s39 = smul.u32 %s38, 16
    %v40 = vld [vmem:[#allocation3] sm:$0xff]
    %v41 = vld [vmem:[#allocation3 + $0x8] sm:$0xff]
    %v42 = vsub.f32 1.0, %v40
    %v43 = vsub.f32 1.0, %v41
    %v44 = vmax.f32 %v42, 0.0
    %v45 = vmax.f32 %v43, 0.0
    %s46 = sadd.s32 %s39, 16
    %p47 = scmp.le.s32.totalorder %s46, 16
    // Predicated region
    $region14: #{tpu_custom_call.1} parent=1 // pred_check
      %p48 = pneg %p47
    $region15: #{tpu_custom_call.1} parent=1 // pred_check_branch
      %50 = sbr.rel (%p48) target = $region17
    $region16: #{tpu_custom_call.1} parent=1 // pred_region
      %v51 = vld [vmem:[#allocation2] sm:$0xff]
      %v52 = vadd.f32 %v44, %v45
      %v53 = vadd.f32 %v51, %v52
      %54 = vst [vmem:[#allocation2] sm:$0xff] %v53
    $region17: #{tpu_custom_call.1} parent=1 // pred_fallthru
      _
    %p55 = scmp.gt.s32.totalorder %s46, 16
    // Predicated region
    $region18: #{tpu_custom_call.1} parent=1 // pred_check
      %p56 = pneg %p55
    $region19: #{tpu_custom_call.1} parent=1 // pred_check_branch
      %58 = sbr.rel (%p56) target = $region21
    $region20: #{tpu_custom_call.1} parent=1 // pred_region
      %v59 = vlaneseq
      %v60 = vshrl.u32 %v59, 7
      %v61 = vadd.s32 %v60, 8
      %s62 = ssub.s32 16, %s39
      %v63 = vstv %s62
      %vm64 = vcmp.lt.s32.totalorder %v60, %v63
      %vm65 = vcmp.lt.s32.totalorder %v61, %v63
      %v66 = vsel %vm64, %v44, 0.0
      %v67 = vsel %vm65, %v45, 0.0
      %v68 = vld [vmem:[#allocation2] sm:$0xff]
      %v69 = vadd.f32 %v66, %v67
      %v70 = vadd.f32 %v68, %v69
      %71 = vst [vmem:[#allocation2] sm:$0xff] %v70
    $region21: #{tpu_custom_call.1} parent=1 // pred_fallthru
      _
    // Predicated region
    $region22: #{tpu_custom_call.1} parent=1 // pred_check
      %p72 = pneg %p33
    $region23: #{tpu_custom_call.1} parent=1 // pred_check_branch
      %74 = sbr.rel (%p72) target = $region25
    $region24: #{tpu_custom_call.1} parent=1 // pred_region
      %v75 = vld [vmem:[#allocation2] sm:$0xff]
      %76 = vadd.xlane.f32.xlu0 %v75
      %v77 = vpop.xlane.xlu0 %76
      %v78 = vrot.slane %v77, 4
      %v79 = vadd.f32 %v77, %v78
      %v80 = vrot.slane %v79, 2
      %v81 = vadd.f32 %v79, %v80
      %v82 = vrot.slane %v81, 1
      %v83 = vadd.f32 %v81, %v82
      %s84 = vtos %v83
      %s85 = scalar_lea.smem [#allocation6], 0
      %86 = sst [smem:[%s85]] %s84
    $region25: #{tpu_custom_call.1} parent=1 // pred_fallthru
      _
    // Predicated region
    $region26: #{tpu_custom_call.1} parent=1 // pred_check
      _
    $region27: #{tpu_custom_call.1} parent=1 // pred_check_branch
      %88 = sbr.rel (0) target = $region29
    $region28: #{tpu_custom_call.1} parent=1 // pred_region
      %s90 = ssub.s32 16, 16
      %91 = vsyncadd [#allocation5], %s90
      %94 = dma.smem_to_hbm [#allocation6], 16, %s1, [#allocation5]
    $region29: #{tpu_custom_call.1} parent=1 // pred_fallthru
      _
    // Predicated region
    $region30: #{tpu_custom_call.1} parent=1 // pred_check
      _
    $region31: #{tpu_custom_call.1} parent=1 // pred_check_branch
      %96 = sbr.rel (0) target = $region33
    $region32: #{tpu_custom_call.1} parent=1 // pred_region
      %97 = dma.done [#allocation5], 16
    $region33: #{tpu_custom_call.1} parent=1 // pred_fallthru
      _
    %98 = sfence
    %99 = vsyncpa [#allocation4], 1
    %100 = vsyncpa [#allocation5], 1

</llo_original>
